<compile_context>
chip_gen: v6e
topology: v6e:2x2x1
jax: 0.10.0
libtpu: 0.0.40
codegen_flags: <defaults>
</compile_context>

<pallas_src>
import functools
import math

import jax
import jax.numpy as jnp
from jax.experimental import pallas as pl
from jax.experimental.pallas import tpu as pltpu


def _round_up(x, m):
    return -(-x // m) * m


def _bayar_constrained_weight(kernel_param, in_channels, out_channels, kernel_size):
    """Replicates BayarConv2d.bayarConstraint (pure parameter glue, plain JAX)."""
    k = kernel_param / jnp.sum(kernel_param, axis=-1, keepdims=True)
    minus1 = -jnp.ones((in_channels, out_channels, 1), kernel_param.dtype)
    ctr = kernel_size ** 2 // 2
    real = jnp.concatenate([k[:, :, :ctr], minus1, k[:, :, ctr:]], axis=2)
    # Raw memory reshape (in, out, k*k) -> (out, in, k, k), exactly as PyTorch does.
    return real.reshape(out_channels, in_channels, kernel_size, kernel_size)  # OIHW


def _banded_weight(w_oihw, kernel_size, tw):
    """wband[dh, (j+dw)*Cin + ci, j*Cout + co] = w_oihw[co, ci, dh, dw]  (f32)."""
    KH = KW = kernel_size
    Cin, Cout = w_oihw.shape[1], w_oihw.shape[0]
    w_hwio = jnp.transpose(w_oihw, (2, 3, 1, 0))              # (KH, KW, Cin, Cout)
    m = jnp.arange(tw + KW - 1)                                # halo column index
    j = jnp.arange(tw)                                         # tile-local output column
    diff = m[None, :] - j[:, None]                             # (Tw, Tw+KW-1)
    gathered = w_hwio[:, jnp.clip(diff, 0, KW - 1)]            # (KH, Tw, Tw+KW-1, Cin, Cout)
    mask = (diff >= 0) & (diff < KW)
    wband = jnp.where(mask[None, :, :, None, None], gathered, 0.0)
    wband = wband.transpose(0, 2, 3, 1, 4)                     # (KH, m, Cin, j, Cout)
    return wband.reshape(KH, (tw + KW - 1) * Cin, tw * Cout)


def _tpu_generation_info():
    """Best-effort (VMEM capacity, MXU/lane target, TensorCores per chip); safe fallbacks."""
    vmem_cap = None
    lane_target = 128
    n_tc = 1
    kind = ""
    try:
        kind = jax.devices()[0].device_kind.lower()
    except Exception:
        pass
    if ("v7" in kind) or ("tpu7" in kind):
        vmem_cap, lane_target, n_tc = 64 * 2**20, 256, 2       # 64 MiB VMEM / TC, 2 TCs
    elif ("v6" in kind) or ("trillium" in kind):
        vmem_cap, lane_target = 128 * 2**20, 256               # 256-wide MXU
    elif ("v5" in kind) or ("v4" in kind):
        vmem_cap = 128 * 2**20
    try:
        info = pltpu.get_tpu_info()
        cap = getattr(info, "vmem_capacity_bytes", None)
        if cap:
            vmem_cap = int(cap)
    except Exception:
        pass
    if vmem_cap is None:
        vmem_cap = 64 * 2**20                                  # conservative: works everywhere
    return vmem_cap, lane_target, n_tc


def _choose_tiles(wo, cin, cout, lane_target):
    """Output-width tile Tw and tile count so that (when tiling) Tw*Cout is a multiple of
    the lane target (dense stores, full MXU width) and Tw*Cin a multiple of 128 (aligned
    in-kernel input windows)."""
    cdiv = lambda a, b: -(-a // b)
    unit_out = lane_target // math.gcd(cout, lane_target)
    unit_in = 128 // math.gcd(cin, 128)
    unit = unit_in * unit_out // math.gcd(unit_in, unit_out)
    max_lanes = 4 * lane_target
    if unit * cout > max_lanes:
        tw_max = unit
    else:
        tw_max = (max_lanes // (unit * cout)) * unit
    if tw_max >= wo:
        # Single tile covering the (padded) full output width; pad so the output lane
        # dim is >= lane_target and a multiple of it (no masked vst).
        return cdiv(wo, unit_out) * unit_out, 1
    n_tw = cdiv(wo, tw_max)
    tw = cdiv(cdiv(wo, unit), n_tw) * unit                     # balanced, multiple of `unit`
    return tw, n_tw


def _choose_nb(n, h, ho_pad, xw, kh, kblk, lanes_out, in_item, out_item, budget,
               m_target=1024):
    """Images per grid step: fill the MXU M dim, bounded by the real VMEM working set."""
    best = 1
    for nb in range(1, n + 1):
        if n % nb:
            continue
        block_bytes = (2 * nb * h * xw * in_item                 # double-buffered input block
                       + 2 * nb * ho_pad * lanes_out * out_item  # double-buffered output block
                       + nb * ho_pad * kh * kblk * in_item       # im2row LHS scratch
                       + nb * ho_pad * lanes_out * 4)            # f32 accumulator
        if nb > 1 and block_bytes > budget:
            break
        best = nb
        if nb * ho_pad >= m_target:
            break
    return best


def _conv_kernel(x_ref, w_ref, o_ref, lhs_ref, *, KH, Ho, Kblk, TwCin, n_tw):
    # x_ref:   (Nb, H, Xw)             bf16  -- resident per batch block (constant over jt)
    # w_ref:   (KH*Kblk, Tw*Cout)      bf16  -- constant over the whole grid (resident)
    # o_ref:   (Nb, Ho_pad, Tw*Cout)
    # lhs_ref: (Nb, Ho_pad, KH*Kblk)   bf16 scratch (im2row LHS)
    Nb, Ho_pad, KKblk = lhs_ref.shape
    if n_tw == 1:
        col0 = 0                                           # static: single width tile
    else:
        align = TwCin & (-TwCin)                           # largest power-of-two divisor
        col0 = pl.multiple_of(pl.program_id(1) * TwCin, align)
    # Assemble the im2row LHS once (KH shifted copies), then a single long-contraction
    # MXU matmul; rows [Ho, Ho_pad) are never written -> garbage output rows that the
    # wrapper slices off.
    for dh in range(KH):
        lhs_ref[:, 0:Ho, dh * Kblk:(dh + 1) * Kblk] = (
            x_ref[:, dh:dh + Ho, pl.ds(col0, Kblk)])
    lhs = lhs_ref[...].reshape(Nb * Ho_pad, KKblk)
    acc = jnp.dot(lhs, w_ref[...], preferred_element_type=jnp.float32)
    o_ref[...] = acc.reshape(o_ref.shape).astype(o_ref.dtype)     # dense, unmasked store


def bayar_conv2d(x, kernel_param, *, kernel_size=5, stride=1, padding=0,
                 compute_dtype=jnp.bfloat16, out_dtype=None):
    """x: (N, Cin, H, W) -> (N, Cout, Ho, Wo). Matches BayarConv2d.forward (stride==1)."""
    assert stride == 1  # TODO(synk): strided conv not implemented in the Pallas kernel.
    Cin, Cout, _ = kernel_param.shape
    N, Cx, H, W = x.shape
    assert Cx == Cin
    out_dtype = x.dtype if out_dtype is None else out_dtype   # keep PyTorch f32 semantics

    w_oihw = _bayar_constrained_weight(kernel_param, Cin, Cout, kernel_size)

    if padding:
        # TODO(synk): fold padding into the kernel's halo handling to avoid this HBM copy.
        x = jnp.pad(x, ((0, 0), (0, 0), (padding, padding), (padding, padding)))
        H += 2 * padding
        W += 2 * padding

    KH = KW = kernel_size
    Ho, Wo = H - KH + 1, W - KW + 1
    assert Ho >= 1 and Wo >= 1

    vmem_cap, lane_target, n_tc = _tpu_generation_info()

    # Static, shape-derived tiling.
    Tw, n_tw = _choose_tiles(Wo, Cin, Cout, lane_target)
    Wo_pad = n_tw * Tw
    Ho_pad = _round_up(Ho, 16)                                # sublane-dense stores/reshapes
    Khalo = (Tw + KW - 1) * Cin
    Kblk = _round_up(Khalo, 128)                              # lane-aligned per-dh LHS block
    Xw = (n_tw - 1) * Tw * Cin + Kblk                         # padded input lane width

    in_item = jnp.dtype(compute_dtype).itemsize
    out_item = jnp.dtype(out_dtype).itemsize
    # TODO(synk): pipeline_mode=pl.Buffered(1) on the weight spec would drop its 2nd buffer.
    w_bytes = 2 * KH * Kblk * Tw * Cout * in_item
    budget = max(min(24 * 2**20, vmem_cap // 4) - w_bytes, 0)
    Nb = _choose_nb(N, H, Ho_pad, Xw, KH, Kblk, Tw * Cout, in_item, out_item, budget)
    if n_tc > 1 and N >= 2 and (N // Nb) * n_tw < 2:
        # v7x: keep >= 2 grid blocks so both TensorCores get work.
        for nb in range(Nb - 1, 0, -1):
            if N % nb == 0:
                Nb = nb
                break
    n_bb = N // Nb

    # Compact banded weight, zero-padded to lane-aligned per-dh blocks, flattened to 2-D.
    wband = _banded_weight(w_oihw, kernel_size, Tw)           # (KH, Khalo, Tw*Cout) f32
    wflat = jnp.pad(wband, ((0, 0), (0, Kblk - Khalo), (0, 0)))
    wflat = wflat.reshape(KH * Kblk, Tw * Cout).astype(compute_dtype)

    # NCHW -> (N, H, W*Cin) NHWC slab, MXU dtype, zero-pad the lane dim to Xw.
    # TODO(synk): the NCHW<->NHWC transposes disappear if the surrounding model is NHWC.
    x3 = jnp.transpose(x, (0, 2, 3, 1)).reshape(N, H, W * Cin).astype(compute_dtype)
    x3 = jnp.pad(x3, ((0, 0), (0, 0), (0, Xw - W * Cin)))

    cost = pl.CostEstimate(
        flops=int(2 * N * Ho * Wo * KH * KW * Cin * Cout),
        transcendentals=0,
        bytes_accessed=int(N * H * Xw * in_item
                           + N * Ho_pad * Wo_pad * Cout * out_item
                           + KH * Kblk * Tw * Cout * in_item),
    )

    out3 = pl.pallas_call(
        functools.partial(_conv_kernel, KH=KH, Ho=Ho, Kblk=Kblk, TwCin=Tw * Cin,
                          n_tw=n_tw),
        out_shape=jax.ShapeDtypeStruct((N, Ho_pad, Wo_pad * Cout), out_dtype),
        grid_spec=pltpu.PrefetchScalarGridSpec(
            num_scalar_prefetch=0,
            grid=(n_bb, n_tw),
            in_specs=[
                # Full-width batch block; index depends only on b -> stays resident
                # across all width tiles (each input byte read from HBM once).
                pl.BlockSpec((Nb, H, Xw), lambda b, jt: (b, 0, 0)),
                # Banded weight: same block for every grid point -> resident in VMEM.
                pl.BlockSpec((KH * Kblk, Tw * Cout), lambda b, jt: (0, 0)),
            ],
            out_specs=pl.BlockSpec((Nb, Ho_pad, Tw * Cout), lambda b, jt: (b, 0, jt)),
            scratch_shapes=[pltpu.VMEM((Nb, Ho_pad, KH * Kblk), compute_dtype)],
        ),
        compiler_params=pltpu.CompilerParams(
            dimension_semantics=("parallel", "parallel"),
            vmem_limit_bytes=int(max(vmem_cap - 16 * 2**20, 32 * 2**20)),
        ),
        cost_estimate=cost,
    )(x3, wflat)

    # (N, Ho_pad, Wo_pad*Cout) -> (N, Ho_pad, Wo_pad, Cout) -> slice padding -> NCHW.
    # TODO(synk): return NHWC directly (and bf16) if the consuming model allows it.
    out = out3.reshape(N, Ho_pad, Wo_pad, Cout)[:, :Ho, :Wo, :].transpose(0, 3, 1, 2)
    return out


if __name__ == "__main__":
    key = jax.random.PRNGKey(0)
    k_param_key, k_x_key = jax.random.split(key)

    in_channels, out_channels, ks = 4, 4, 5
    N, H, W = 2, 16, 16

    # Deterministic parameter init (torch.rand -> uniform [0, 1)).
    kernel_param = jax.random.uniform(
        k_param_key, (in_channels, out_channels, ks * ks - 1), jnp.float32)
    x = jax.random.normal(k_x_key, (N, in_channels, H, W), jnp.float32)

    fwd = jax.jit(functools.partial(bayar_conv2d, kernel_size=ks, stride=1, padding=0))
    out = jax.block_until_ready(fwd(x, kernel_param))

    # Reference: XLA conv with the same constrained weight and the same numerics
    # (bf16 MXU inputs, f32 accumulation) as the kernel.
    w = _bayar_constrained_weight(kernel_param, in_channels, out_channels, ks)
    ref = jax.lax.conv_general_dilated(
        x.astype(jnp.bfloat16), w.astype(jnp.bfloat16),
        window_strides=(1, 1), padding="VALID",
        dimension_numbers=("NCHW", "OIHW", "NCHW"),
        preferred_element_type=jnp.float32)
    assert out.shape == ref.shape, (out.shape, ref.shape)
    assert jnp.allclose(out, ref.astype(out.dtype), atol=1e-2, rtol=1e-2)

    print("KERNEL_OK")
</pallas_src>

<mosaic_0001>
module attributes {stable_mosaic.version = 11 : i64} {
  func.func @_conv_kernel(%arg0: i32, %arg1: i32, %arg2: memref<2x16x256xbf16, #tpu.memory_space<vmem>>, %arg3: memref<1280x128xbf16, #tpu.memory_space<vmem>>, %arg4: memref<2x16x128xf32, #tpu.memory_space<vmem>>, %arg5: memref<2x16x1280xbf16, #tpu.memory_space<vmem>>) attributes {dimension_semantics = [#tpu.dimension_semantics<parallel>, #tpu.dimension_semantics<parallel>], iteration_bounds = array<i64: 1, 1>, scalar_prefetch = 0 : i64, scratch_operands = 1 : i64, tpu.core_type = #tpu.core_type<tc>, window_params = [{transform_indices = @transform_0, window_bounds = array<i64: 2, 16, 256>}, {pipeline_mode = #tpu.pipeline_mode<synchronous>, transform_indices = @transform_1, window_bounds = array<i64: 1280, 128>}, {transform_indices = @transform_2, window_bounds = array<i64: 2, 16, 128>}]} {
    %c0 = arith.constant 0 : index
    %c0_0 = arith.constant 0 : index
    %c0_1 = arith.constant 0 : index
    %0 = vector.load %arg2[%c0, %c0_0, %c0_1] : memref<2x16x256xbf16, #tpu.memory_space<vmem>>, vector<2x12x256xbf16>
    %c0_2 = arith.constant 0 : index
    %c0_3 = arith.constant 0 : index
    %c0_4 = arith.constant 0 : index
    %1 = vector.load %arg5[%c0_2, %c0_3, %c0_4] : memref<2x16x1280xbf16, #tpu.memory_space<vmem>>, vector<2x12x256xbf16>
    tpu.vector_store %arg5[%c0_2, %c0_3, %c0_4], %0 {strides = array<i32>} : memref<2x16x1280xbf16, #tpu.memory_space<vmem>>, vector<2x12x256xbf16>,
    %c0_5 = arith.constant 0 : index
    %c1 = arith.constant 1 : index
    %c0_6 = arith.constant 0 : index
    %2 = vector.load %arg2[%c0_5, %c1, %c0_6] : memref<2x16x256xbf16, #tpu.memory_space<vmem>>, vector<2x12x256xbf16>
    %c0_7 = arith.constant 0 : index
    %c0_8 = arith.constant 0 : index
    %c256 = arith.constant 256 : index
    %3 = vector.load %arg5[%c0_7, %c0_8, %c256] : memref<2x16x1280xbf16, #tpu.memory_space<vmem>>, vector<2x12x256xbf16>
    tpu.vector_store %arg5[%c0_7, %c0_8, %c256], %2 {strides = array<i32>} : memref<2x16x1280xbf16, #tpu.memory_space<vmem>>, vector<2x12x256xbf16>,
    %c0_9 = arith.constant 0 : index
    %c2 = arith.constant 2 : index
    %c0_10 = arith.constant 0 : index
    %4 = vector.load %arg2[%c0_9, %c2, %c0_10] : memref<2x16x256xbf16, #tpu.memory_space<vmem>>, vector<2x12x256xbf16>
    %c0_11 = arith.constant 0 : index
    %c0_12 = arith.constant 0 : index
    %c512 = arith.constant 512 : index
    %5 = vector.load %arg5[%c0_11, %c0_12, %c512] : memref<2x16x1280xbf16, #tpu.memory_space<vmem>>, vector<2x12x256xbf16>
    tpu.vector_store %arg5[%c0_11, %c0_12, %c512], %4 {strides = array<i32>} : memref<2x16x1280xbf16, #tpu.memory_space<vmem>>, vector<2x12x256xbf16>,
    %c0_13 = arith.constant 0 : index
    %c3 = arith.constant 3 : index
    %c0_14 = arith.constant 0 : index
    %6 = vector.load %arg2[%c0_13, %c3, %c0_14] : memref<2x16x256xbf16, #tpu.memory_space<vmem>>, vector<2x12x256xbf16>
    %c0_15 = arith.constant 0 : index
    %c0_16 = arith.constant 0 : index
    %c768 = arith.constant 768 : index
    %7 = vector.load %arg5[%c0_15, %c0_16, %c768] : memref<2x16x1280xbf16, #tpu.memory_space<vmem>>, vector<2x12x256xbf16>
    tpu.vector_store %arg5[%c0_15, %c0_16, %c768], %6 {strides = array<i32>} : memref<2x16x1280xbf16, #tpu.memory_space<vmem>>, vector<2x12x256xbf16>,
    %c0_17 = arith.constant 0 : index
    %c4 = arith.constant 4 : index
    %c0_18 = arith.constant 0 : index
    %8 = vector.load %arg2[%c0_17, %c4, %c0_18] : memref<2x16x256xbf16, #tpu.memory_space<vmem>>, vector<2x12x256xbf16>
    %c0_19 = arith.constant 0 : index
    %c0_20 = arith.constant 0 : index
    %c1024 = arith.constant 1024 : index
    %9 = vector.load %arg5[%c0_19, %c0_20, %c1024] : memref<2x16x1280xbf16, #tpu.memory_space<vmem>>, vector<2x12x256xbf16>
    tpu.vector_store %arg5[%c0_19, %c0_20, %c1024], %8 {strides = array<i32>} : memref<2x16x1280xbf16, #tpu.memory_space<vmem>>, vector<2x12x256xbf16>,
    %c0_21 = arith.constant 0 : index
    %c0_22 = arith.constant 0 : index
    %c0_23 = arith.constant 0 : index
    %10 = vector.load %arg5[%c0_21, %c0_22, %c0_23] : memref<2x16x1280xbf16, #tpu.memory_space<vmem>>, vector<2x16x1280xbf16>
    %11 = vector.shape_cast %10 : vector<2x16x1280xbf16> to vector<32x1280xbf16>
    %c0_24 = arith.constant 0 : index
    %c0_25 = arith.constant 0 : index
    %12 = vector.load %arg3[%c0_24, %c0_25] : memref<1280x128xbf16, #tpu.memory_space<vmem>>, vector<1280x128xbf16>
    %cst = arith.constant dense<0.000000e+00> : vector<32x128xf32>
    %13 = tpu.matmul %11, %12, %cst {dimension_numbers = #tpu.dot_dimension_numbers<[1], [0], [0], [1], [0, 0, 1, 1], [], []>} : vector<32x1280xbf16>, vector<1280x128xbf16>, vector<32x128xf32> -> vector<32x128xf32>
    %14 = vector.shape_cast %13 : vector<32x128xf32> to vector<2x16x128xf32>
    %c0_26 = arith.constant 0 : index
    %c0_27 = arith.constant 0 : index
    %c0_28 = arith.constant 0 : index
    %15 = vector.load %arg4[%c0_26, %c0_27, %c0_28] : memref<2x16x128xf32, #tpu.memory_space<vmem>>, vector<2x16x128xf32>
    tpu.vector_store %arg4[%c0_26, %c0_27, %c0_28], %14 {strides = array<i32>} : memref<2x16x128xf32, #tpu.memory_space<vmem>>, vector<2x16x128xf32>,
    return
  }
  func.func @transform_0(%arg0: i32, %arg1: i32) -> (i32, i32, i32) {
    %c0_i32 = arith.constant 0 : i32
    %c0_i32_0 = arith.constant 0 : i32
    %c0_i32_1 = arith.constant 0 : i32
    return %arg0, %c0_i32, %c0_i32_0 : i32, i32, i32
  }
  func.func @transform_1(%arg0: i32, %arg1: i32) -> (i32, i32) {
    %c0_i32 = arith.constant 0 : i32
    %c0_i32_0 = arith.constant 0 : i32
    %c0_i32_1 = arith.constant 0 : i32
    return %c0_i32, %c0_i32_0 : i32, i32
  }
  func.func @transform_2(%arg0: i32, %arg1: i32) -> (i32, i32, i32) {
    %c0_i32 = arith.constant 0 : i32
    %c0_i32_0 = arith.constant 0 : i32
    return %arg0, %c0_i32, %arg1 : i32, i32, i32
  }
}

</mosaic_0001>

<llo_original>
// kernel: bayar_conv2d.1
$region0: #{bayar_conv2d.1}
  #allocation0 [shape = 'u32[]', space=smem, size = 0x4, offset = 0x4, fixed_abs, tag = 'smem constant byte address 0x4 - core index']
  #allocation1 [shape = 'u32[144,128]{1,0:T(1,128)}', space=vmem, size = 0x12000, scoped, tag = 'internal scratch']
  #allocation2 [shape = 'bf16[2,16,1280]{2,1,0:T(8,128)(2,1)}', space=vmem, size = 0x14000, scoped, tag = 'scratch operand']
  %s0 = inlined_call_operand.vmem [shape: bf16[2,16,256], index: 0, kind: input, shape index: {}]
  %s1 = inlined_call_operand.vmem [shape: bf16[1280,128], index: 1, kind: input, shape index: {}]
  %s2 = inlined_call_operand.vmem [shape: f32[2,16,128], index: 2, kind: output, shape index: {}]
  %s3 = sld [smem:[#allocation0]]
  $region18: #{bayar_conv2d.1} parent=0
    _
  %s5 = ssub.s32 1, %s3
  %s6 = scalar_select 0, %s5, %s3
  // Predicated region
  $region2: #{bayar_conv2d.1} parent=0 // pred_check
    _
  $region3: #{bayar_conv2d.1} parent=0 // pred_check_branch
    %8 = sbr.rel (0) target = $region5
  $region4: #{bayar_conv2d.1} parent=0 // pred_region
    _
  $region5: #{bayar_conv2d.1} parent=0 // pred_fallthru
    _
  // Predicated region
  $region6: #{bayar_conv2d.1} parent=0 // pred_check
    _
  $region7: #{bayar_conv2d.1} parent=0 // pred_check_branch
    %10 = sbr.rel (0) target = $region9
  $region8: #{bayar_conv2d.1} parent=0 // pred_region
    _
  $region9: #{bayar_conv2d.1} parent=0 // pred_fallthru
    _
  %v12 = vld [vmem:[%s0] sm:$0xff]
  %v13 = vld [vmem:[%s0 + $0x8] sm:$0x33]
  %v14 = vld [vmem:[%s0 + $0x10] sm:$0xff]
  %v15 = vld [vmem:[%s0 + $0x18] sm:$0x33]
  %16 = vst [vmem:[#allocation2] sm:$0xff] %v12
  %17 = vst [vmem:[#allocation2 + $0x28] sm:$0x33] %v13
  %18 = vst [vmem:[#allocation2 + $0x50] sm:$0xff] %v14
  %19 = vst [vmem:[#allocation2 + $0x78] sm:$0x33] %v15
  %v20 = vld [vmem:[%s0] sm:$0xff]
  %v21 = vld [vmem:[%s0 + $0x8] sm:$0x77]
  %v22 = vld [vmem:[%s0 + $0x10] sm:$0xff]
  %v23 = vld [vmem:[%s0 + $0x18] sm:$0x77]
  %vm24 = vsmask.f32 3328
  %vm25 = vsmask.f32 7440
  %vm26 = vmor %vm24, %vm25
  %v28 = vshrl.u32 %v20, 16
  %v30 = vrot.slane %v28, 4
  %v31 = vshll.u32 %v20, 16
  %v33 = vrot.slane %v31, 5
  %v34 = vor.u32 %v30, %v33
  %v35 = vrot.slane %v34, 4
  %v37 = vshll.u32 %v21, 16
  %v39 = vrot.slane %v37, 5
  %v40 = vsel %vm26, %v35, %v39
  %v41 = vshrl.u32 %v21, 16
  %v43 = vrot.slane %v41, 4
  %v44 = vor.u32 %v43, %v39
  %v45 = vrot.slane %v44, 4
  %v47 = vshrl.u32 %v22, 16
  %v49 = vrot.slane %v47, 4
  %v50 = vshll.u32 %v22, 16
  %v52 = vrot.slane %v50, 5
  %v53 = vor.u32 %v49, %v52
  %v54 = vrot.slane %v53, 4
  %v56 = vshll.u32 %v23, 16
  %v58 = vrot.slane %v56, 5
  %v59 = vsel %vm26, %v54, %v58
  %v60 = vshrl.u32 %v23, 16
  %v62 = vrot.slane %v60, 4
  %v63 = vor.u32 %v62, %v58
  %v64 = vrot.slane %v63, 4
  %69 = vst [vmem:[#allocation2 + $0x8] sm:$0xff] %v40
  %70 = vst [vmem:[#allocation2 + $0x30] sm:$0x33] %v45
  %71 = vst [vmem:[#allocation2 + $0x58] sm:$0xff] %v59
  %72 = vst [vmem:[#allocation2 + $0x80] sm:$0x33] %v64
  %v73 = vld [vmem:[%s0] sm:$0xee]
  %v74 = vld [vmem:[%s0 + $0x8] sm:$0x77]
  %v75 = vld [vmem:[%s0 + $0x10] sm:$0xee]
  %v76 = vld [vmem:[%s0 + $0x18] sm:$0x77]
  %vm81 = vcmask 1042432
  %vm82 = vcmask 1046532
  %vm83 = vmor %vm81, %vm82
  %v84 = vrot.slane %v73, 5
  %v85 = vrot.slane %v84, 4
  %v86 = vrot.slane %v74, 5
  %v87 = vsel %vm83, %v85, %v86
  %v88 = vrot.slane %v86, 4
  %v89 = vrot.slane %v75, 5
  %v90 = vrot.slane %v89, 4
  %v91 = vrot.slane %v76, 5
  %v92 = vsel %vm83, %v90, %v91
  %v93 = vrot.slane %v91, 4
  %98 = vst [vmem:[#allocation2 + $0x10] sm:$0xff] %v87
  %99 = vst [vmem:[#allocation2 + $0x38] sm:$0x33] %v88
  %100 = vst [vmem:[#allocation2 + $0x60] sm:$0xff] %v92
  %101 = vst [vmem:[#allocation2 + $0x88] sm:$0x33] %v93
  %v102 = vld [vmem:[%s0] sm:$0xee]
  %v103 = vld [vmem:[%s0 + $0x8] sm:$0xff]
  %v104 = vld [vmem:[%s0 + $0x10] sm:$0xee]
  %v105 = vld [vmem:[%s0 + $0x18] sm:$0xff]
  %vm106 = vsmask.f32 2304
  %vm107 = vsmask.f32 6416
  %vm108 = vmor %vm106, %vm107
  %v110 = vshrl.u32 %v102, 16
  %v112 = vrot.slane %v110, 5
  %v113 = vshll.u32 %v102, 16
  %v115 = vrot.slane %v113, 6
  %v116 = vor.u32 %v112, %v115
  %v117 = vrot.slane %v116, 4
  %v119 = vshrl.u32 %v103, 16
  %v121 = vrot.slane %v119, 5
  %v122 = vshll.u32 %v103, 16
  %v124 = vrot.slane %v122, 6
  %v125 = vor.u32 %v121, %v124
  %v126 = vsel %vm108, %v117, %v125
  %v127 = vrot.slane %v125, 4
  %v129 = vshrl.u32 %v104, 16
  %v131 = vrot.slane %v129, 5
  %v132 = vshll.u32 %v104, 16
  %v134 = vrot.slane %v132, 6
  %v135 = vor.u32 %v131, %v134
  %v136 = vrot.slane %v135, 4
  %v138 = vshrl.u32 %v105, 16
  %v140 = vrot.slane %v138, 5
  %v141 = vshll.u32 %v105, 16
  %v143 = vrot.slane %v141, 6
  %v144 = vor.u32 %v140, %v143
  %v145 = vsel %vm108, %v136, %v144
  %v146 = vrot.slane %v144, 4
  %151 = vst [vmem:[#allocation2 + $0x18] sm:$0xff] %v126
  %152 = vst [vmem:[#allocation2 + $0x40] sm:$0x33] %v127
  %153 = vst [vmem:[#allocation2 + $0x68] sm:$0xff] %v145
  %154 = vst [vmem:[#allocation2 + $0x90] sm:$0x33] %v146
  %v155 = vld [vmem:[%s0] sm:$0xcc]
  %v156 = vld [vmem:[%s0 + $0x8] sm:$0xff]
  %v157 = vld [vmem:[%s0 + $0x10] sm:$0xcc]
  %v158 = vld [vmem:[%s0 + $0x18] sm:$0xff]
  %vm163 = vcmask 1041408
  %vm164 = vcmask 1045508
  %vm165 = vmor %vm163, %vm164
  %v166 = vrot.slane %v155, 6
  %v167 = vrot.slane %v166, 4
  %v168 = vrot.slane %v156, 6
  %v169 = vsel %vm165, %v167, %v168
  %v170 = vrot.slane %v168, 4
  %v171 = vrot.slane %v157, 6
  %v172 = vrot.slane %v171, 4
  %v173 = vrot.slane %v158, 6
  %v174 = vsel %vm165, %v172, %v173
  %v175 = vrot.slane %v173, 4
  %180 = vst [vmem:[#allocation2 + $0x20] sm:$0xff] %v169
  %181 = vst [vmem:[#allocation2 + $0x48] sm:$0x33] %v170
  %182 = vst [vmem:[#allocation2 + $0x70] sm:$0xff] %v174
  %183 = vst [vmem:[#allocation2 + $0x98] sm:$0x33] %v175
  %v184 = vld [vmem:[#allocation2] sm:$0xff]
  %v185 = vld [vmem:[#allocation2 + $0x8] sm:$0xff]
  %v186 = vld [vmem:[#allocation2 + $0x10] sm:$0xff]
  %v187 = vld [vmem:[#allocation2 + $0x18] sm:$0xff]
  %v188 = vld [vmem:[#allocation2 + $0x20] sm:$0xff]
  %v189 = vld [vmem:[#allocation2 + $0x28] sm:$0xff]
  %v190 = vld [vmem:[#allocation2 + $0x30] sm:$0xff]
  %v191 = vld [vmem:[#allocation2 + $0x38] sm:$0xff]
  %v192 = vld [vmem:[#allocation2 + $0x40] sm:$0xff]
  %v193 = vld [vmem:[#allocation2 + $0x48] sm:$0xff]
  %v194 = vld [vmem:[#allocation2 + $0x50] sm:$0xff]
  %v195 = vld [vmem:[#allocation2 + $0x58] sm:$0xff]
  %v196 = vld [vmem:[#allocation2 + $0x60] sm:$0xff]
  %v197 = vld [vmem:[#allocation2 + $0x68] sm:$0xff]
  %v198 = vld [vmem:[#allocation2 + $0x70] sm:$0xff]
  %v199 = vld [vmem:[#allocation2 + $0x78] sm:$0xff]
  %v200 = vld [vmem:[#allocation2 + $0x80] sm:$0xff]
  %v201 = vld [vmem:[#allocation2 + $0x88] sm:$0xff]
  %v202 = vld [vmem:[#allocation2 + $0x90] sm:$0xff]
  %v203 = vld [vmem:[#allocation2 + $0x98] sm:$0xff]
  %v204 = vld [vmem:[%s1] sm:$0xf]
  %v205 = vld [vmem:[%s1 + $0x4] sm:$0xf]
  %v206 = vld [vmem:[%s1 + $0x8] sm:$0xf]
  %v207 = vld [vmem:[%s1 + $0xc] sm:$0xf]
  %v208 = vld [vmem:[%s1 + $0x10] sm:$0xf]
  %v209 = vld [vmem:[%s1 + $0x14] sm:$0xf]
  %v210 = vld [vmem:[%s1 + $0x18] sm:$0xf]
  %v211 = vld [vmem:[%s1 + $0x1c] sm:$0xf]
  %v212 = vld [vmem:[%s1 + $0x20] sm:$0xf]
  %v213 = vld [vmem:[%s1 + $0x24] sm:$0xf]
  %v214 = vld [vmem:[%s1 + $0x28] sm:$0xf]
  %v215 = vld [vmem:[%s1 + $0x2c] sm:$0xf]
  %v216 = vld [vmem:[%s1 + $0x30] sm:$0xf]
  %v217 = vld [vmem:[%s1 + $0x34] sm:$0xf]
  %v218 = vld [vmem:[%s1 + $0x38] sm:$0xf]
  %v219 = vld [vmem:[%s1 + $0x3c] sm:$0xf]
  %v220 = vld [vmem:[%s1 + $0x40] sm:$0xf]
  %v221 = vld [vmem:[%s1 + $0x44] sm:$0xf]
  %v222 = vld [vmem:[%s1 + $0x48] sm:$0xf]
  %v223 = vld [vmem:[%s1 + $0x4c] sm:$0xf]
  %v224 = vld [vmem:[%s1 + $0x50] sm:$0xf]
  %v225 = vld [vmem:[%s1 + $0x54] sm:$0xf]
  %v226 = vld [vmem:[%s1 + $0x58] sm:$0xf]
  %v227 = vld [vmem:[%s1 + $0x5c] sm:$0xf]
  %v228 = vld [vmem:[%s1 + $0x60] sm:$0xf]
  %v229 = vld [vmem:[%s1 + $0x64] sm:$0xf]
  %v230 = vld [vmem:[%s1 + $0x68] sm:$0xf]
  %v231 = vld [vmem:[%s1 + $0x6c] sm:$0xf]
  %v232 = vld [vmem:[%s1 + $0x70] sm:$0xf]
  %v233 = vld [vmem:[%s1 + $0x74] sm:$0xf]
  %v234 = vld [vmem:[%s1 + $0x78] sm:$0xf]
  %v235 = vld [vmem:[%s1 + $0x7c] sm:$0xf]
  %v236 = vld [vmem:[%s1 + $0x80] sm:$0xf]
  %v237 = vld [vmem:[%s1 + $0x84] sm:$0xf]
  %v238 = vld [vmem:[%s1 + $0x88] sm:$0xf]
  %v239 = vld [vmem:[%s1 + $0x8c] sm:$0xf]
  %v240 = vld [vmem:[%s1 + $0x90] sm:$0xf]
  %v241 = vld [vmem:[%s1 + $0x94] sm:$0xf]
  %v242 = vld [vmem:[%s1 + $0x98] sm:$0xf]
  %v243 = vld [vmem:[%s1 + $0x9c] sm:$0xf]
  %v244 = vld [vmem:[%s1 + $0xa0] sm:$0xf]
  %v245 = vld [vmem:[%s1 + $0xa4] sm:$0xf]
  %v246 = vld [vmem:[%s1 + $0xa8] sm:$0xf]
  %v247 = vld [vmem:[%s1 + $0xac] sm:$0xf]
  %v248 = vld [vmem:[%s1 + $0xb0] sm:$0xf]
  %v249 = vld [vmem:[%s1 + $0xb4] sm:$0xf]
  %v250 = vld [vmem:[%s1 + $0xb8] sm:$0xf]
  %v251 = vld [vmem:[%s1 + $0xbc] sm:$0xf]
  %v252 = vld [vmem:[%s1 + $0xc0] sm:$0xf]
  %v253 = vld [vmem:[%s1 + $0xc4] sm:$0xf]
  %v254 = vld [vmem:[%s1 + $0xc8] sm:$0xf]
  %v255 = vld [vmem:[%s1 + $0xcc] sm:$0xf]
  %v256 = vld [vmem:[%s1 + $0xd0] sm:$0xf]
  %v257 = vld [vmem:[%s1 + $0xd4] sm:$0xf]
  %v258 = vld [vmem:[%s1 + $0xd8] sm:$0xf]
  %v259 = vld [vmem:[%s1 + $0xdc] sm:$0xf]
  %v260 = vld [vmem:[%s1 + $0xe0] sm:$0xf]
  %v261 = vld [vmem:[%s1 + $0xe4] sm:$0xf]
  %v262 = vld [vmem:[%s1 + $0xe8] sm:$0xf]
  %v263 = vld [vmem:[%s1 + $0xec] sm:$0xf]
  %v264 = vld [vmem:[%s1 + $0xf0] sm:$0xf]
  %v265 = vld [vmem:[%s1 + $0xf4] sm:$0xf]
  %v266 = vld [vmem:[%s1 + $0xf8] sm:$0xf]
  %v267 = vld [vmem:[%s1 + $0xfc] sm:$0xf]
  %v268 = vld [vmem:[%s1 + $0x100] sm:$0xf]
  %v269 = vld [vmem:[%s1 + $0x104] sm:$0xf]
  %v270 = vld [vmem:[%s1 + $0x108] sm:$0xf]
  %v271 = vld [vmem:[%s1 + $0x10c] sm:$0xf]
  %v272 = vld [vmem:[%s1 + $0x110] sm:$0xf]
  %v273 = vld [vmem:[%s1 + $0x114] sm:$0xf]
  %v274 = vld [vmem:[%s1 + $0x118] sm:$0xf]
  %v275 = vld [vmem:[%s1 + $0x11c] sm:$0xf]
  %v276 = vld [vmem:[%s1 + $0x120] sm:$0xf]
  %v277 = vld [vmem:[%s1 + $0x124] sm:$0xf]
  %v278 = vld [vmem:[%s1 + $0x128] sm:$0xf]
  %v279 = vld [vmem:[%s1 + $0x12c] sm:$0xf]
  %v280 = vld [vmem:[%s1 + $0x130] sm:$0xf]
  %v281 = vld [vmem:[%s1 + $0x134] sm:$0xf]
  %v282 = vld [vmem:[%s1 + $0x138] sm:$0xf]
  %v283 = vld [vmem:[%s1 + $0x13c] sm:$0xf]
  %v284 = vld [vmem:[%s1 + $0x140] sm:$0xf]
  %v285 = vld [vmem:[%s1 + $0x144] sm:$0xf]
  %v286 = vld [vmem:[%s1 + $0x148] sm:$0xf]
  %v287 = vld [vmem:[%s1 + $0x14c] sm:$0xf]
  %v288 = vld [vmem:[%s1 + $0x150] sm:$0xf]
  %v289 = vld [vmem:[%s1 + $0x154] sm:$0xf]
  %v290 = vld [vmem:[%s1 + $0x158] sm:$0xf]
  %v291 = vld [vmem:[%s1 + $0x15c] sm:$0xf]
  %v292 = vld [vmem:[%s1 + $0x160] sm:$0xf]
  %v293 = vld [vmem:[%s1 + $0x164] sm:$0xf]
  %v294 = vld [vmem:[%s1 + $0x168] sm:$0xf]
  %v295 = vld [vmem:[%s1 + $0x16c] sm:$0xf]
  %v296 = vld [vmem:[%s1 + $0x170] sm:$0xf]
  %v297 = vld [vmem:[%s1 + $0x174] sm:$0xf]
  %v298 = vld [vmem:[%s1 + $0x178] sm:$0xf]
  %v299 = vld [vmem:[%s1 + $0x17c] sm:$0xf]
  %v300 = vld [vmem:[%s1 + $0x180] sm:$0xf]
  %v301 = vld [vmem:[%s1 + $0x184] sm:$0xf]
  %v302 = vld [vmem:[%s1 + $0x188] sm:$0xf]
  %v303 = vld [vmem:[%s1 + $0x18c] sm:$0xf]
  %v304 = vld [vmem:[%s1 + $0x190] sm:$0xf]
  %v305 = vld [vmem:[%s1 + $0x194] sm:$0xf]
  %v306 = vld [vmem:[%s1 + $0x198] sm:$0xf]
  %v307 = vld [vmem:[%s1 + $0x19c] sm:$0xf]
  %v308 = vld [vmem:[%s1 + $0x1a0] sm:$0xf]
  %v309 = vld [vmem:[%s1 + $0x1a4] sm:$0xf]
  %v310 = vld [vmem:[%s1 + $0x1a8] sm:$0xf]
  %v311 = vld [vmem:[%s1 + $0x1ac] sm:$0xf]
  %v312 = vld [vmem:[%s1 + $0x1b0] sm:$0xf]
  %v313 = vld [vmem:[%s1 + $0x1b4] sm:$0xf]
  %v314 = vld [vmem:[%s1 + $0x1b8] sm:$0xf]
  %v315 = vld [vmem:[%s1 + $0x1bc] sm:$0xf]
  %v316 = vld [vmem:[%s1 + $0x1c0] sm:$0xf]
  %v317 = vld [vmem:[%s1 + $0x1c4] sm:$0xf]
  %v318 = vld [vmem:[%s1 + $0x1c8] sm:$0xf]
  %v319 = vld [vmem:[%s1 + $0x1cc] sm:$0xf]
  %v320 = vld [vmem:[%s1 + $0x1d0] sm:$0xf]
  %v321 = vld [vmem:[%s1 + $0x1d4] sm:$0xf]
  %v322 = vld [vmem:[%s1 + $0x1d8] sm:$0xf]
  %v323 = vld [vmem:[%s1 + $0x1dc] sm:$0xf]
  %v324 = vld [vmem:[%s1 + $0x1e0] sm:$0xf]
  %v325 = vld [vmem:[%s1 + $0x1e4] sm:$0xf]
  %v326 = vld [vmem:[%s1 + $0x1e8] sm:$0xf]
  %v327 = vld [vmem:[%s1 + $0x1ec] sm:$0xf]
  %v328 = vld [vmem:[%s1 + $0x1f0] sm:$0xf]
  %v329 = vld [vmem:[%s1 + $0x1f4] sm:$0xf]
  %v330 = vld [vmem:[%s1 + $0x1f8] sm:$0xf]
  %v331 = vld [vmem:[%s1 + $0x1fc] sm:$0xf]
  %v332 = vld [vmem:[%s1 + $0x200] sm:$0xf]
  %v333 = vld [vmem:[%s1 + $0x204] sm:$0xf]
  %v334 = vld [vmem:[%s1 + $0x208] sm:$0xf]
  %v335 = vld [vmem:[%s1 + $0x20c] sm:$0xf]
  %v336 = vld [vmem:[%s1 + $0x210] sm:$0xf]
  %v337 = vld [vmem:[%s1 + $0x214] sm:$0xf]
  %v338 = vld [vmem:[%s1 + $0x218] sm:$0xf]
  %v339 = vld [vmem:[%s1 + $0x21c] sm:$0xf]
  %v340 = vld [vmem:[%s1 + $0x220] sm:$0xf]
  %v341 = vld [vmem:[%s1 + $0x224] sm:$0xf]
  %v342 = vld [vmem:[%s1 + $0x228] sm:$0xf]
  %v343 = vld [vmem:[%s1 + $0x22c] sm:$0xf]
  %v344 = vld [vmem:[%s1 + $0x230] sm:$0xf]
  %v345 = vld [vmem:[%s1 + $0x234] sm:$0xf]
  %v346 = vld [vmem:[%s1 + $0x238] sm:$0xf]
  %v347 = vld [vmem:[%s1 + $0x23c] sm:$0xf]
  %v348 = vld [vmem:[%s1 + $0x240] sm:$0xf]
  %v349 = vld [vmem:[%s1 + $0x244] sm:$0xf]
  %v350 = vld [vmem:[%s1 + $0x248] sm:$0xf]
  %v351 = vld [vmem:[%s1 + $0x24c] sm:$0xf]
  %v352 = vld [vmem:[%s1 + $0x250] sm:$0xf]
  %v353 = vld [vmem:[%s1 + $0x254] sm:$0xf]
  %v354 = vld [vmem:[%s1 + $0x258] sm:$0xf]
  %v355 = vld [vmem:[%s1 + $0x25c] sm:$0xf]
  %v356 = vld [vmem:[%s1 + $0x260] sm:$0xf]
  %v357 = vld [vmem:[%s1 + $0x264] sm:$0xf]
  %v358 = vld [vmem:[%s1 + $0x268] sm:$0xf]
  %v359 = vld [vmem:[%s1 + $0x26c] sm:$0xf]
  %v360 = vld [vmem:[%s1 + $0x270] sm:$0xf]
  %v361 = vld [vmem:[%s1 + $0x274] sm:$0xf]
  %v362 = vld [vmem:[%s1 + $0x278] sm:$0xf]
  %v363 = vld [vmem:[%s1 + $0x27c] sm:$0xf]
  %v384 = vunpack.c.l.b16 %v184
  %v385 = vunpack.c.h.b16 %v184
  %v386 = vunpack.c.l.b16 %v185
  %v387 = vunpack.c.h.b16 %v185
  %v388 = vunpack.c.l.b16 %v186
  %v389 = vunpack.c.h.b16 %v186
  %v390 = vunpack.c.l.b16 %v187
  %v391 = vunpack.c.h.b16 %v187
  %v392 = vunpack.c.l.b16 %v188
  %v393 = vunpack.c.h.b16 %v188
  %v394 = vunpack.c.l.b16 %v189
  %v395 = vunpack.c.h.b16 %v189
  %v396 = vunpack.c.l.b16 %v190
  %v397 = vunpack.c.h.b16 %v190
  %v398 = vunpack.c.l.b16 %v191
  %v399 = vunpack.c.h.b16 %v191
  %v400 = vunpack.c.l.b16 %v192
  %v401 = vunpack.c.h.b16 %v192
  %v402 = vunpack.c.l.b16 %v193
  %v403 = vunpack.c.h.b16 %v193
  %v404 = vunpack.c.l.b16 %v194
  %v405 = vunpack.c.h.b16 %v194
  %v406 = vunpack.c.l.b16 %v195
  %v407 = vunpack.c.h.b16 %v195
  %v408 = vunpack.c.l.b16 %v196
  %v409 = vunpack.c.h.b16 %v196
  %v410 = vunpack.c.l.b16 %v197
  %v411 = vunpack.c.h.b16 %v197
  %v412 = vunpack.c.l.b16 %v198
  %v413 = vunpack.c.h.b16 %v198
  %v414 = vunpack.c.l.b16 %v199
  %v415 = vunpack.c.h.b16 %v199
  %v416 = vunpack.c.l.b16 %v200
  %v417 = vunpack.c.h.b16 %v200
  %v418 = vunpack.c.l.b16 %v201
  %v419 = vunpack.c.h.b16 %v201
  %v420 = vunpack.c.l.b16 %v202
  %v421 = vunpack.c.h.b16 %v202
  %v422 = vunpack.c.l.b16 %v203
  %v423 = vunpack.c.h.b16 %v203
  %v424 = vpack.c.b16 %v394, %v384
  %v425 = vpack.c.b16 %v395, %v385
  %v426 = vpack.c.b16 %v396, %v386
  %v427 = vpack.c.b16 %v397, %v387
  %v428 = vpack.c.b16 %v398, %v388
  %v429 = vpack.c.b16 %v399, %v389
  %v430 = vpack.c.b16 %v400, %v390
  %v431 = vpack.c.b16 %v401, %v391
  %v432 = vpack.c.b16 %v402, %v392
  %v433 = vpack.c.b16 %v403, %v393
  %v434 = vpack.c.b16 %v414, %v404
  %v435 = vpack.c.b16 %v415, %v405
  %v436 = vpack.c.b16 %v416, %v406
  %v437 = vpack.c.b16 %v417, %v407
  %v438 = vpack.c.b16 %v418, %v408
  %v439 = vpack.c.b16 %v419, %v409
  %v440 = vpack.c.b16 %v420, %v410
  %v441 = vpack.c.b16 %v421, %v411
  %v442 = vpack.c.b16 %v422, %v412
  %v443 = vpack.c.b16 %v423, %v413
  %v624 = vunpack.c.l.b16 %v204
  %v625 = vunpack.c.l.b16 %v205
  %v626 = vunpack.c.l.b16 %v206
  %v627 = vunpack.c.l.b16 %v207
  %v628 = vunpack.c.l.b16 %v208
  %v629 = vunpack.c.l.b16 %v209
  %v630 = vunpack.c.l.b16 %v210
  %v631 = vunpack.c.l.b16 %v211
  %v632 = vunpack.c.l.b16 %v212
  %v633 = vunpack.c.l.b16 %v213
  %v634 = vunpack.c.l.b16 %v214
  %v635 = vunpack.c.l.b16 %v215
  %v636 = vunpack.c.l.b16 %v216
  %v637 = vunpack.c.l.b16 %v217
  %v638 = vunpack.c.l.b16 %v218
  %v639 = vunpack.c.l.b16 %v219
  %v640 = vunpack.c.l.b16 %v220
  %v641 = vunpack.c.l.b16 %v221
  %v642 = vunpack.c.l.b16 %v222
  %v643 = vunpack.c.l.b16 %v223
  %v644 = vunpack.c.l.b16 %v224
  %v645 = vunpack.c.l.b16 %v225
  %v646 = vunpack.c.l.b16 %v226
  %v647 = vunpack.c.l.b16 %v227
  %v648 = vunpack.c.l.b16 %v228
  %v649 = vunpack.c.l.b16 %v229
  %v650 = vunpack.c.l.b16 %v230
  %v651 = vunpack.c.l.b16 %v231
  %v652 = vunpack.c.l.b16 %v232
  %v653 = vunpack.c.l.b16 %v233
  %v654 = vunpack.c.l.b16 %v234
  %v655 = vunpack.c.l.b16 %v235
  %v656 = vunpack.c.l.b16 %v236
  %v657 = vunpack.c.l.b16 %v237
  %v658 = vunpack.c.l.b16 %v238
  %v659 = vunpack.c.l.b16 %v239
  %v660 = vunpack.c.l.b16 %v240
  %v661 = vunpack.c.l.b16 %v241
  %v662 = vunpack.c.l.b16 %v242
  %v663 = vunpack.c.l.b16 %v243
  %v664 = vunpack.c.l.b16 %v244
  %v665 = vunpack.c.l.b16 %v245
  %v666 = vunpack.c.l.b16 %v246
  %v667 = vunpack.c.l.b16 %v247
  %v668 = vunpack.c.l.b16 %v248
  %v669 = vunpack.c.l.b16 %v249
  %v670 = vunpack.c.l.b16 %v250
  %v671 = vunpack.c.l.b16 %v251
  %v672 = vunpack.c.l.b16 %v252
  %v673 = vunpack.c.l.b16 %v253
  %v674 = vunpack.c.l.b16 %v254
  %v675 = vunpack.c.l.b16 %v255
  %v676 = vunpack.c.l.b16 %v256
  %v677 = vunpack.c.l.b16 %v257
  %v678 = vunpack.c.l.b16 %v258
  %v679 = vunpack.c.l.b16 %v259
  %v680 = vunpack.c.l.b16 %v260
  %v681 = vunpack.c.l.b16 %v261
  %v682 = vunpack.c.l.b16 %v262
  %v683 = vunpack.c.l.b16 %v263
  %v684 = vunpack.c.l.b16 %v264
  %v685 = vunpack.c.l.b16 %v265
  %v686 = vunpack.c.l.b16 %v266
  %v687 = vunpack.c.l.b16 %v267
  %v688 = vunpack.c.l.b16 %v268
  %v689 = vunpack.c.l.b16 %v269
  %v690 = vunpack.c.l.b16 %v270
  %v691 = vunpack.c.l.b16 %v271
  %v692 = vunpack.c.l.b16 %v272
  %v693 = vunpack.c.l.b16 %v273
  %v694 = vunpack.c.l.b16 %v274
  %v695 = vunpack.c.l.b16 %v275
  %v696 = vunpack.c.l.b16 %v276
  %v697 = vunpack.c.l.b16 %v277
  %v698 = vunpack.c.l.b16 %v278
  %v699 = vunpack.c.l.b16 %v279
  %v700 = vunpack.c.l.b16 %v280
  %v701 = vunpack.c.l.b16 %v281
  %v702 = vunpack.c.l.b16 %v282
  %v703 = vunpack.c.l.b16 %v283
  %v704 = vunpack.c.l.b16 %v284
  %v705 = vunpack.c.l.b16 %v285
  %v706 = vunpack.c.l.b16 %v286
  %v707 = vunpack.c.l.b16 %v287
  %v708 = vunpack.c.l.b16 %v288
  %v709 = vunpack.c.l.b16 %v289
  %v710 = vunpack.c.l.b16 %v290
  %v711 = vunpack.c.l.b16 %v291
  %v712 = vunpack.c.l.b16 %v292
  %v713 = vunpack.c.l.b16 %v293
  %v714 = vunpack.c.l.b16 %v294
  %v715 = vunpack.c.l.b16 %v295
  %v716 = vunpack.c.l.b16 %v296
  %v717 = vunpack.c.l.b16 %v297
  %v718 = vunpack.c.l.b16 %v298
  %v719 = vunpack.c.l.b16 %v299
  %v720 = vunpack.c.l.b16 %v300
  %v721 = vunpack.c.l.b16 %v301
  %v722 = vunpack.c.l.b16 %v302
  %v723 = vunpack.c.l.b16 %v303
  %v724 = vunpack.c.l.b16 %v304
  %v725 = vunpack.c.l.b16 %v305
  %v726 = vunpack.c.l.b16 %v306
  %v727 = vunpack.c.l.b16 %v307
  %v728 = vunpack.c.l.b16 %v308
  %v729 = vunpack.c.l.b16 %v309
  %v730 = vunpack.c.l.b16 %v310
  %v731 = vunpack.c.l.b16 %v311
  %v732 = vunpack.c.l.b16 %v312
  %v733 = vunpack.c.l.b16 %v313
  %v734 = vunpack.c.l.b16 %v314
  %v735 = vunpack.c.l.b16 %v315
  %v736 = vunpack.c.l.b16 %v316
  %v737 = vunpack.c.l.b16 %v317
  %v738 = vunpack.c.l.b16 %v318
  %v739 = vunpack.c.l.b16 %v319
  %v740 = vunpack.c.l.b16 %v320
  %v741 = vunpack.c.l.b16 %v321
  %v742 = vunpack.c.l.b16 %v322
  %v743 = vunpack.c.l.b16 %v323
  %v744 = vunpack.c.l.b16 %v324
  %v745 = vunpack.c.l.b16 %v325
  %v746 = vunpack.c.l.b16 %v326
  %v747 = vunpack.c.l.b16 %v327
  %v748 = vunpack.c.l.b16 %v328
  %v749 = vunpack.c.l.b16 %v329
  %v750 = vunpack.c.l.b16 %v330
  %v751 = vunpack.c.l.b16 %v331
  %v752 = vunpack.c.l.b16 %v332
  %v753 = vunpack.c.l.b16 %v333
  %v754 = vunpack.c.l.b16 %v334
  %v755 = vunpack.c.l.b16 %v335
  %v756 = vunpack.c.l.b16 %v336
  %v757 = vunpack.c.l.b16 %v337
  %v758 = vunpack.c.l.b16 %v338
  %v759 = vunpack.c.l.b16 %v339
  %v760 = vunpack.c.l.b16 %v340
  %v761 = vunpack.c.l.b16 %v341
  %v762 = vunpack.c.l.b16 %v342
  %v763 = vunpack.c.l.b16 %v343
  %v764 = vunpack.c.l.b16 %v344
  %v765 = vunpack.c.l.b16 %v345
  %v766 = vunpack.c.l.b16 %v346
  %v767 = vunpack.c.l.b16 %v347
  %v768 = vunpack.c.l.b16 %v348
  %v769 = vunpack.c.l.b16 %v349
  %v770 = vunpack.c.l.b16 %v350
  %v771 = vunpack.c.l.b16 %v351
  %v772 = vunpack.c.l.b16 %v352
  %v773 = vunpack.c.l.b16 %v353
  %v774 = vunpack.c.l.b16 %v354
  %v775 = vunpack.c.l.b16 %v355
  %v776 = vunpack.c.l.b16 %v356
  %v777 = vunpack.c.l.b16 %v357
  %v778 = vunpack.c.l.b16 %v358
  %v779 = vunpack.c.l.b16 %v359
  %v780 = vunpack.c.l.b16 %v360
  %v781 = vunpack.c.l.b16 %v361
  %v782 = vunpack.c.l.b16 %v362
  %v783 = vunpack.c.l.b16 %v363
  %v784 = vpack.c.b16 %v625, %v624
  %v785 = vpack.c.b16 %v627, %v626
  %v786 = vpack.c.b16 %v629, %v628
  %v787 = vpack.c.b16 %v631, %v630
  %v788 = vpack.c.b16 %v633, %v632
  %v789 = vpack.c.b16 %v635, %v634
  %v790 = vpack.c.b16 %v637, %v636
  %v791 = vpack.c.b16 %v639, %v638
  %v792 = vpack.c.b16 %v641, %v640
  %v793 = vpack.c.b16 %v643, %v642
  %v794 = vpack.c.b16 %v645, %v644
  %v795 = vpack.c.b16 %v647, %v646
  %v796 = vpack.c.b16 %v649, %v648
  %v797 = vpack.c.b16 %v651, %v650
  %v798 = vpack.c.b16 %v653, %v652
  %v799 = vpack.c.b16 %v655, %v654
  %v800 = vpack.c.b16 %v657, %v656
  %v801 = vpack.c.b16 %v659, %v658
  %v802 = vpack.c.b16 %v661, %v660
  %v803 = vpack.c.b16 %v663, %v662
  %v804 = vpack.c.b16 %v665, %v664
  %v805 = vpack.c.b16 %v667, %v666
  %v806 = vpack.c.b16 %v669, %v668
  %v807 = vpack.c.b16 %v671, %v670
  %v808 = vpack.c.b16 %v673, %v672
  %v809 = vpack.c.b16 %v675, %v674
  %v810 = vpack.c.b16 %v677, %v676
  %v811 = vpack.c.b16 %v679, %v678
  %v812 = vpack.c.b16 %v681, %v680
  %v813 = vpack.c.b16 %v683, %v682
  %v814 = vpack.c.b16 %v685, %v684
  %v815 = vpack.c.b16 %v687, %v686
  %v816 = vpack.c.b16 %v689, %v688
  %v817 = vpack.c.b16 %v691, %v690
  %v818 = vpack.c.b16 %v693, %v692
  %v819 = vpack.c.b16 %v695, %v694
  %v820 = vpack.c.b16 %v697, %v696
  %v821 = vpack.c.b16 %v699, %v698
  %v822 = vpack.c.b16 %v701, %v700
  %v823 = vpack.c.b16 %v703, %v702
  %v824 = vpack.c.b16 %v705, %v704
  %v825 = vpack.c.b16 %v707, %v706
  %v826 = vpack.c.b16 %v709, %v708
  %v827 = vpack.c.b16 %v711, %v710
  %v828 = vpack.c.b16 %v713, %v712
  %v829 = vpack.c.b16 %v715, %v714
  %v830 = vpack.c.b16 %v717, %v716
  %v831 = vpack.c.b16 %v719, %v718
  %v832 = vpack.c.b16 %v721, %v720
  %v833 = vpack.c.b16 %v723, %v722
  %v834 = vpack.c.b16 %v725, %v724
  %v835 = vpack.c.b16 %v727, %v726
  %v836 = vpack.c.b16 %v729, %v728
  %v837 = vpack.c.b16 %v731, %v730
  %v838 = vpack.c.b16 %v733, %v732
  %v839 = vpack.c.b16 %v735, %v734
  %v840 = vpack.c.b16 %v737, %v736
  %v841 = vpack.c.b16 %v739, %v738
  %v842 = vpack.c.b16 %v741, %v740
  %v843 = vpack.c.b16 %v743, %v742
  %v844 = vpack.c.b16 %v745, %v744
  %v845 = vpack.c.b16 %v747, %v746
  %v846 = vpack.c.b16 %v749, %v748
  %v847 = vpack.c.b16 %v751, %v750
  %v848 = vpack.c.b16 %v753, %v752
  %v849 = vpack.c.b16 %v755, %v754
  %v850 = vpack.c.b16 %v757, %v756
  %v851 = vpack.c.b16 %v759, %v758
  %v852 = vpack.c.b16 %v761, %v760
  %v853 = vpack.c.b16 %v763, %v762
  %v854 = vpack.c.b16 %v765, %v764
  %v855 = vpack.c.b16 %v767, %v766
  %v856 = vpack.c.b16 %v769, %v768
  %v857 = vpack.c.b16 %v771, %v770
  %v858 = vpack.c.b16 %v773, %v772
  %v859 = vpack.c.b16 %v775, %v774
  %v860 = vpack.c.b16 %v777, %v776
  %v861 = vpack.c.b16 %v779, %v778
  %v862 = vpack.c.b16 %v781, %v780
  %v863 = vpack.c.b16 %v783, %v782
  %944 = vmatprep.subr.bf16.mxu0 0
  %945 = vmatpush1.bf16.msra.mxu0 %v791
  %946 = vmatprep.subr.bf16.mxu0 0
  %947 = vmatpush1.bf16.msra.mxu0 %v790
  %948 = vmatprep.subr.bf16.mxu0 0
  %949 = vmatpush1.bf16.msra.mxu0 %v789
  %950 = vmatprep.subr.bf16.mxu0 0
  %951 = vmatpush1.bf16.msra.mxu0 %v788
  %952 = vmatprep.subr.bf16.mxu0 0
  %953 = vmatpush1.bf16.msra.mxu0 %v787
  %954 = vmatprep.subr.bf16.mxu0 0
  %955 = vmatpush1.bf16.msra.mxu0 %v786
  %956 = vmatprep.subr.bf16.mxu0 0
  %957 = vmatpush1.bf16.msra.mxu0 %v785
  %958 = vmatprep.subr.bf16.mxu0 0
  %959 = vmatpush1.bf16.msra.mxu0 %v784
  %960 = vmatprep.subr.bf16.mxu0 0
  %961 = vmatpush2.bf16.msra.mxu0 %v799
  %962 = vmatprep.subr.bf16.mxu0 0
  %963 = vmatpush2.bf16.msra.mxu0 %v798
  %964 = vmatprep.subr.bf16.mxu0 0
  %965 = vmatpush2.bf16.msra.mxu0 %v797
  %966 = vmatprep.subr.bf16.mxu0 0
  %967 = vmatpush2.bf16.msra.mxu0 %v796
  %968 = vmatprep.subr.bf16.mxu0 0
  %969 = vmatpush2.bf16.msra.mxu0 %v795
  %970 = vmatprep.subr.bf16.mxu0 0
  %971 = vmatpush2.bf16.msra.mxu0 %v794
  %972 = vmatprep.subr.bf16.mxu0 0
  %973 = vmatpush2.bf16.msra.mxu0 %v793
  %974 = vmatprep.subr.bf16.mxu0 0
  %975 = vmatpush2.bf16.msra.mxu0 %v792
  %976 = vmatprep.mubr.bf16.mxu0 %v425
  %977 = vmatmul.mubr.bf16.gmra.mxu0 %v424
  %v978 = vpop.f32.mrf.mxu0
  %v979 = vadd.f32 0.0, %v978
  %v980 = vpop.f32.mrf.mxu0
  %v981 = vpop.f32.mrf.mxu0
  %v982 = vadd.f32 0.0, %v981
  %v983 = vpop.f32.mrf.mxu0
  %984 = vmatprep.mubr.bf16.mxu0 %v435
  %985 = vmatmul.mubr.bf16.gmra.mxu0 %v434
  %v986 = vpop.f32.mrf.mxu0
  %v987 = vadd.f32 0.0, %v986
  %v988 = vpop.f32.mrf.mxu0
  %v989 = vpop.f32.mrf.mxu0
  %v990 = vadd.f32 0.0, %v989
  %v991 = vpop.f32.mrf.mxu0
  %992 = vdwg.mxu0
  %993 = vmatprep.subr.bf16.mxu0 0
  %994 = vmatpush1.bf16.msra.mxu0 %v807
  %995 = vmatprep.subr.bf16.mxu0 0
  %996 = vmatpush1.bf16.msra.mxu0 %v806
  %997 = vmatprep.subr.bf16.mxu0 0
  %998 = vmatpush1.bf16.msra.mxu0 %v805
  %999 = vmatprep.subr.bf16.mxu0 0
  %1000 = vmatpush1.bf16.msra.mxu0 %v804
  %1001 = vmatprep.subr.bf16.mxu0 0
  %1002 = vmatpush1.bf16.msra.mxu0 %v803
  %1003 = vmatprep.subr.bf16.mxu0 0
  %1004 = vmatpush1.bf16.msra.mxu0 %v802
  %1005 = vmatprep.subr.bf16.mxu0 0
  %1006 = vmatpush1.bf16.msra.mxu0 %v801
  %1007 = vmatprep.subr.bf16.mxu0 0
  %1008 = vmatpush1.bf16.msra.mxu0 %v800
  %1009 = vmatprep.subr.bf16.mxu0 0
  %1010 = vmatpush2.bf16.msra.mxu0 %v815
  %1011 = vmatprep.subr.bf16.mxu0 0
  %1012 = vmatpush2.bf16.msra.mxu0 %v814
  %1013 = vmatprep.subr.bf16.mxu0 0
  %1014 = vmatpush2.bf16.msra.mxu0 %v813
  %1015 = vmatprep.subr.bf16.mxu0 0
  %1016 = vmatpush2.bf16.msra.mxu0 %v812
  %1017 = vmatprep.subr.bf16.mxu0 0
  %1018 = vmatpush2.bf16.msra.mxu0 %v811
  %1019 = vmatprep.subr.bf16.mxu0 0
  %1020 = vmatpush2.bf16.msra.mxu0 %v810
  %1021 = vmatprep.subr.bf16.mxu0 0
  %1022 = vmatpush2.bf16.msra.mxu0 %v809
  %1023 = vmatprep.subr.bf16.mxu0 0
  %1024 = vmatpush2.bf16.msra.mxu0 %v808
  %1025 = vmatprep.mubr.bf16.mxu0 %v427
  %1026 = vmatmul.mubr.bf16.gmra.mxu0 %v426
  %v1027 = vpop.f32.mrf.mxu0
  %v1028 = vadd.f32 %v979, %v1027
  %v1029 = vpop.f32.mrf.mxu0
  %v1030 = vpop.f32.mrf.mxu0
  %v1031 = vadd.f32 %v982, %v1030
  %v1032 = vpop.f32.mrf.mxu0
  %1033 = vmatprep.mubr.bf16.mxu0 %v437
  %1034 = vmatmul.mubr.bf16.gmra.mxu0 %v436
  %v1035 = vpop.f32.mrf.mxu0
  %v1036 = vadd.f32 %v987, %v1035
  %v1037 = vpop.f32.mrf.mxu0
  %v1038 = vpop.f32.mrf.mxu0
  %v1039 = vadd.f32 %v990, %v1038
  %v1040 = vpop.f32.mrf.mxu0
  %1041 = vdwg.mxu0
  %1042 = vmatprep.subr.bf16.mxu0 0
  %1043 = vmatpush1.bf16.msra.mxu0 %v823
  %1044 = vmatprep.subr.bf16.mxu0 0
  %1045 = vmatpush1.bf16.msra.mxu0 %v822
  %1046 = vmatprep.subr.bf16.mxu0 0
  %1047 = vmatpush1.bf16.msra.mxu0 %v821
  %1048 = vmatprep.subr.bf16.mxu0 0
  %1049 = vmatpush1.bf16.msra.mxu0 %v820
  %1050 = vmatprep.subr.bf16.mxu0 0
  %1051 = vmatpush1.bf16.msra.mxu0 %v819
  %1052 = vmatprep.subr.bf16.mxu0 0
  %1053 = vmatpush1.bf16.msra.mxu0 %v818
  %1054 = vmatprep.subr.bf16.mxu0 0
  %1055 = vmatpush1.bf16.msra.mxu0 %v817
  %1056 = vmatprep.subr.bf16.mxu0 0
  %1057 = vmatpush1.bf16.msra.mxu0 %v816
  %1058 = vmatprep.subr.bf16.mxu0 0
  %1059 = vmatpush2.bf16.msra.mxu0 %v831
  %1060 = vmatprep.subr.bf16.mxu0 0
  %1061 = vmatpush2.bf16.msra.mxu0 %v830
  %1062 = vmatprep.subr.bf16.mxu0 0
  %1063 = vmatpush2.bf16.msra.mxu0 %v829
  %1064 = vmatprep.subr.bf16.mxu0 0
  %1065 = vmatpush2.bf16.msra.mxu0 %v828
  %1066 = vmatprep.subr.bf16.mxu0 0
  %1067 = vmatpush2.bf16.msra.mxu0 %v827
  %1068 = vmatprep.subr.bf16.mxu0 0
  %1069 = vmatpush2.bf16.msra.mxu0 %v826
  %1070 = vmatprep.subr.bf16.mxu0 0
  %1071 = vmatpush2.bf16.msra.mxu0 %v825
  %1072 = vmatprep.subr.bf16.mxu0 0
  %1073 = vmatpush2.bf16.msra.mxu0 %v824
  %1074 = vmatprep.mubr.bf16.mxu0 %v429
  %1075 = vmatmul.mubr.bf16.gmra.mxu0 %v428
  %v1076 = vpop.f32.mrf.mxu0
  %v1077 = vadd.f32 %v1028, %v1076
  %v1078 = vpop.f32.mrf.mxu0
  %v1079 = vpop.f32.mrf.mxu0
  %v1080 = vadd.f32 %v1031, %v1079
  %v1081 = vpop.f32.mrf.mxu0
  %1082 = vmatprep.mubr.bf16.mxu0 %v439
  %1083 = vmatmul.mubr.bf16.gmra.mxu0 %v438
  %v1084 = vpop.f32.mrf.mxu0
  %v1085 = vadd.f32 %v1036, %v1084
  %v1086 = vpop.f32.mrf.mxu0
  %v1087 = vpop.f32.mrf.mxu0
  %v1088 = vadd.f32 %v1039, %v1087
  %v1089 = vpop.f32.mrf.mxu0
  %1090 = vdwg.mxu0
  %1091 = vmatprep.subr.bf16.mxu0 0
  %1092 = vmatpush1.bf16.msra.mxu0 %v839
  %1093 = vmatprep.subr.bf16.mxu0 0
  %1094 = vmatpush1.bf16.msra.mxu0 %v838
  %1095 = vmatprep.subr.bf16.mxu0 0
  %1096 = vmatpush1.bf16.msra.mxu0 %v837
  %1097 = vmatprep.subr.bf16.mxu0 0
  %1098 = vmatpush1.bf16.msra.mxu0 %v836
  %1099 = vmatprep.subr.bf16.mxu0 0
  %1100 = vmatpush1.bf16.msra.mxu0 %v835
  %1101 = vmatprep.subr.bf16.mxu0 0
  %1102 = vmatpush1.bf16.msra.mxu0 %v834
  %1103 = vmatprep.subr.bf16.mxu0 0
  %1104 = vmatpush1.bf16.msra.mxu0 %v833
  %1105 = vmatprep.subr.bf16.mxu0 0
  %1106 = vmatpush1.bf16.msra.mxu0 %v832
  %1107 = vmatprep.subr.bf16.mxu0 0
  %1108 = vmatpush2.bf16.msra.mxu0 %v847
  %1109 = vmatprep.subr.bf16.mxu0 0
  %1110 = vmatpush2.bf16.msra.mxu0 %v846
  %1111 = vmatprep.subr.bf16.mxu0 0
  %1112 = vmatpush2.bf16.msra.mxu0 %v845
  %1113 = vmatprep.subr.bf16.mxu0 0
  %1114 = vmatpush2.bf16.msra.mxu0 %v844
  %1115 = vmatprep.subr.bf16.mxu0 0
  %1116 = vmatpush2.bf16.msra.mxu0 %v843
  %1117 = vmatprep.subr.bf16.mxu0 0
  %1118 = vmatpush2.bf16.msra.mxu0 %v842
  %1119 = vmatprep.subr.bf16.mxu0 0
  %1120 = vmatpush2.bf16.msra.mxu0 %v841
  %1121 = vmatprep.subr.bf16.mxu0 0
  %1122 = vmatpush2.bf16.msra.mxu0 %v840
  %1123 = vmatprep.mubr.bf16.mxu0 %v431
  %1124 = vmatmul.mubr.bf16.gmra.mxu0 %v430
  %v1125 = vpop.f32.mrf.mxu0
  %v1126 = vadd.f32 %v1077, %v1125
  %v1127 = vpop.f32.mrf.mxu0
  %v1128 = vpop.f32.mrf.mxu0
  %v1129 = vadd.f32 %v1080, %v1128
  %v1130 = vpop.f32.mrf.mxu0
  %1131 = vmatprep.mubr.bf16.mxu0 %v441
  %1132 = vmatmul.mubr.bf16.gmra.mxu0 %v440
  %v1133 = vpop.f32.mrf.mxu0
  %v1134 = vadd.f32 %v1085, %v1133
  %v1135 = vpop.f32.mrf.mxu0
  %v1136 = vpop.f32.mrf.mxu0
  %v1137 = vadd.f32 %v1088, %v1136
  %v1138 = vpop.f32.mrf.mxu0
  %1139 = vdwg.mxu0
  %1140 = vmatprep.subr.bf16.mxu0 0
  %1141 = vmatpush1.bf16.msra.mxu0 %v855
  %1142 = vmatprep.subr.bf16.mxu0 0
  %1143 = vmatpush1.bf16.msra.mxu0 %v854
  %1144 = vmatprep.subr.bf16.mxu0 0
  %1145 = vmatpush1.bf16.msra.mxu0 %v853
  %1146 = vmatprep.subr.bf16.mxu0 0
  %1147 = vmatpush1.bf16.msra.mxu0 %v852
  %1148 = vmatprep.subr.bf16.mxu0 0
  %1149 = vmatpush1.bf16.msra.mxu0 %v851
  %1150 = vmatprep.subr.bf16.mxu0 0
  %1151 = vmatpush1.bf16.msra.mxu0 %v850
  %1152 = vmatprep.subr.bf16.mxu0 0
  %1153 = vmatpush1.bf16.msra.mxu0 %v849
  %1154 = vmatprep.subr.bf16.mxu0 0
  %1155 = vmatpush1.bf16.msra.mxu0 %v848
  %1156 = vmatprep.subr.bf16.mxu0 0
  %1157 = vmatpush2.bf16.msra.mxu0 %v863
  %1158 = vmatprep.subr.bf16.mxu0 0
  %1159 = vmatpush2.bf16.msra.mxu0 %v862
  %1160 = vmatprep.subr.bf16.mxu0 0
  %1161 = vmatpush2.bf16.msra.mxu0 %v861
  %1162 = vmatprep.subr.bf16.mxu0 0
  %1163 = vmatpush2.bf16.msra.mxu0 %v860
  %1164 = vmatprep.subr.bf16.mxu0 0
  %1165 = vmatpush2.bf16.msra.mxu0 %v859
  %1166 = vmatprep.subr.bf16.mxu0 0
  %1167 = vmatpush2.bf16.msra.mxu0 %v858
  %1168 = vmatprep.subr.bf16.mxu0 0
  %1169 = vmatpush2.bf16.msra.mxu0 %v857
  %1170 = vmatprep.subr.bf16.mxu0 0
  %1171 = vmatpush2.bf16.msra.mxu0 %v856
  %1172 = vmatprep.mubr.bf16.mxu0 %v433
  %1173 = vmatmul.mubr.bf16.gmra.mxu0 %v432
  %v1174 = vpop.f32.mrf.mxu0
  %v1175 = vadd.f32 %v1126, %v1174
  %v1176 = vpop.f32.mrf.mxu0
  %v1177 = vpop.f32.mrf.mxu0
  %v1178 = vadd.f32 %v1129, %v1177
  %v1179 = vpop.f32.mrf.mxu0
  %1180 = vmatprep.mubr.bf16.mxu0 %v443
  %1181 = vmatmul.mubr.bf16.gmra.mxu0 %v442
  %v1182 = vpop.f32.mrf.mxu0
  %v1183 = vadd.f32 %v1134, %v1182
  %v1184 = vpop.f32.mrf.mxu0
  %v1185 = vpop.f32.mrf.mxu0
  %v1186 = vadd.f32 %v1137, %v1185
  %v1187 = vpop.f32.mrf.mxu0
  %1188 = vdwg.mxu0
  %1189 = vst [vmem:[%s2] sm:$0xff] %v1175
  %1190 = vst [vmem:[%s2 + $0x8] sm:$0xff] %v1178
  %1191 = vst [vmem:[%s2 + $0x10] sm:$0xff] %v1183
  %1192 = vst [vmem:[%s2 + $0x18] sm:$0xff] %v1186
  // Predicated region
  $region10: #{bayar_conv2d.1} parent=0 // pred_check
    _
  $region11: #{bayar_conv2d.1} parent=0 // pred_check_branch
    %1194 = sbr.rel (0) target = $region13
  $region12: #{bayar_conv2d.1} parent=0 // pred_region
    _
  $region13: #{bayar_conv2d.1} parent=0 // pred_fallthru
    _
  // Predicated region
  $region14: #{bayar_conv2d.1} parent=0 // pred_check
    _
  $region15: #{bayar_conv2d.1} parent=0 // pred_check_branch
    %1196 = sbr.rel (0) target = $region17
  $region16: #{bayar_conv2d.1} parent=0 // pred_region
    _
  $region17: #{bayar_conv2d.1} parent=0 // pred_fallthru
    _

</llo_original>
